<compile_context>
chip_gen: v5e
topology: v5e:2x2
jax: 0.10.0
libtpu: 0.0.40
codegen_flags: <defaults>
</compile_context>

<pallas_src>
import math

import jax
import jax.numpy as jnp
from jax.experimental import pallas as pl
from jax.experimental.pallas import tpu as pltpu


# ------------------------------ tiling helpers ------------------------------

_TK_MAX = 2048  # max spatial contraction tile (lanes of x / sublanes of rf_t)


def _round_up(x, m):
    return ((x + m - 1) // m) * m


def _plan_spatial(S):
    """Spatial padding + K-tiling plan for a contraction length S = H*W.

    Returns (S_pad, tk, nk): S_pad = round_up(S, 128); tk is the largest multiple of 128
    (<= _TK_MAX) that divides S_pad so the K grid is exact; nk = S_pad // tk.
    """
    S_pad = _round_up(S, 128)
    if S_pad <= _TK_MAX:
        return S_pad, S_pad, 1
    tk = 128
    for cand in range(_TK_MAX, 127, -128):
        if S_pad % cand == 0:
            tk = cand
            break
    return S_pad, tk, S_pad // tk


def _vmem_budget_bytes():
    """Generation-aware VMEM budget for tile selection.

    v5e's default scoped VMEM is only 16 MiB and v7x has only 64 MiB physical, so the
    budget is derived from the chip when possible and falls back to a v5e-safe value.
    """
    try:
        cap = int(pltpu.get_tpu_info().vmem_capacity_bytes)
        if cap > 0:
            return max(12 << 20, min(cap // 3, 28 << 20))
    except Exception:
        pass
    return 16 << 20


def _pick_tn(Nv):
    # Any lane tile up to 512 with a cdiv grid (a trailing partial block only produces
    # garbage in out-of-bounds columns, which are discarded on store).  For small Nv the
    # full extent is used directly (full-dim blocks are always legal).
    return Nv if Nv <= 512 else 512


def _pick_tm(M, tk, tn, budget):
    # Row (sublane) tile for the sigma matmul.  Per the review: if VMEM gets tight, drop
    # tm (towards 128, which already saturates v5e's 128-wide MXU) before shrinking tn.
    tm = 256
    while tm > 8:
        ws = 2 * (tm * tk * 2 + tk * tn * 2 + tm * tn * 4)  # double-buffered x + rf + out
        if ws <= budget - (2 << 20):
            break
        tm //= 2
    return min(tm, _round_up(M, 8))


def _vmem_limit(ws_bytes):
    return int(min(32 << 20, max(16 << 20, ws_bytes + (4 << 20))))


# ------------------------------ Pallas kernels ------------------------------


def _sigma_kernel(x_ref, rf_ref, o_ref):
    # x_ref : (tm, tk) bf16   rows (sublanes) = flattened (batch, channel) pairs
    # rf_ref: (tk, tn) bf16   pre-transposed receptive fields; lanes = voxels
    # o_ref : (tm, tn) f32    resident across the K axis -> acts as the accumulator
    k = pl.program_id(2)
    part = jnp.dot(x_ref[...], rf_ref[...], preferred_element_type=jnp.float32)

    @pl.when(k == 0)
    def _():
        o_ref[...] = part

    @pl.when(k > 0)
    def _():
        o_ref[...] += part


def _encoder_layer_kernel(x_ref, rf_ref, w_ref, o_ref):
    # Fused readout: per (batch b, Nv tile j) accumulate sum_c (x[b,c] @ rf) * w[c] over
    # the spatial K axis.  The per-layer sigma tile only ever lives in registers/VMEM.
    # x_ref : (1, C, tk) bf16   rf_ref: (tk, tn) bf16
    # w_ref : (C, tn)   f32     o_ref : (1, 1, tn) f32 (resident across the K axis)
    k = pl.program_id(2)
    part = jnp.dot(x_ref[0], rf_ref[...], preferred_element_type=jnp.float32)  # (C, tn)
    contrib = jnp.sum(part * w_ref[...], axis=0)[None, None, :]                # (1,1,tn)

    @pl.when(k == 0)
    def _():
        o_ref[...] = contrib

    @pl.when(k > 0)
    def _():
        o_ref[...] += contrib


# ------------------------------ kernel wrappers ------------------------------


def _sigma_matmul(x2, rf_t, tk):
    """x2: [M, S_pad] bf16 (rows = (batch, channel)); rf_t: [S_pad, Nv] bf16.

    Returns [M, Nv] f32 = x2 @ rf_t with f32 accumulation over an S reduction grid axis.
    """
    M, S_pad = x2.shape
    Nv = rf_t.shape[1]
    nk = S_pad // tk
    budget = _vmem_budget_bytes()
    tn = _pick_tn(Nv)
    tm = _pick_tm(M, tk, tn, budget)
    ws = 2 * (tm * tk * 2 + tk * tn * 2 + tm * tn * 4)
    grid = (pl.cdiv(M, tm), pl.cdiv(Nv, tn), nk)
    # Note(v7x): for tiny problems the grid may collapse to a single step and leave one
    # TensorCore idle; real workloads (large M = B*C or large Nv) have >= 2 parallel tiles.
    return pl.pallas_call(
        _sigma_kernel,
        out_shape=jax.ShapeDtypeStruct((M, Nv), jnp.float32),
        grid_spec=pltpu.PrefetchScalarGridSpec(
            num_scalar_prefetch=0,
            grid=grid,
            in_specs=[
                pl.BlockSpec((tm, tk), lambda i, j, k: (i, k)),
                pl.BlockSpec((tk, tn), lambda i, j, k: (k, j)),
            ],
            out_specs=pl.BlockSpec((tm, tn), lambda i, j, k: (i, j)),
        ),
        compiler_params=pltpu.CompilerParams(
            dimension_semantics=("parallel", "parallel", "arbitrary"),
            vmem_limit_bytes=_vmem_limit(ws),
        ),
    )(x2, rf_t)


def _encoder_layer_contrib(x3, rf_t, w_l, tk):
    """Fused per-layer readout contribution.

    x3: [B, C, S_pad] bf16; rf_t: [S_pad, Nv] bf16; w_l: [C, Nv] f32.
    Returns [B, Nv] f32 = sum_c (x3[b, c] @ rf_t) * w_l[c]; the [B, C, Nv] sigma of this
    layer is never materialized in HBM.
    """
    B, C, S_pad = x3.shape
    Nv = rf_t.shape[1]
    nk = S_pad // tk
    budget = _vmem_budget_bytes()
    tn = _pick_tn(Nv)
    if Nv > 512:
        # shrink the Nv tile (multiples of 128) if a very large channel basis would
        # overflow the VMEM budget; C stays a full-extent block dim.
        while tn > 128 and 2 * (C * tk * 2 + tk * tn * 2 + C * tn * 4 + tn * 4) > budget - (2 << 20):
            tn -= 128
    # TODO(synk): for very large channel bases add a channel reduction grid axis (and fold
    # batch into the matmul M dim) instead of keeping C as one full-extent block dim.
    ws = 2 * (C * tk * 2 + tk * tn * 2 + C * tn * 4 + tn * 4)
    grid = (B, pl.cdiv(Nv, tn), nk)

    out3 = pl.pallas_call(
        _encoder_layer_kernel,
        out_shape=jax.ShapeDtypeStruct((B, 1, Nv), jnp.float32),
        grid_spec=pltpu.PrefetchScalarGridSpec(
            num_scalar_prefetch=0,
            grid=grid,
            in_specs=[
                pl.BlockSpec((1, C, tk), lambda b, j, k: (b, 0, k)),
                pl.BlockSpec((tk, tn), lambda b, j, k: (k, j)),
                pl.BlockSpec((C, tn), lambda b, j, k: (0, j)),
            ],
            out_specs=pl.BlockSpec((1, 1, tn), lambda b, j, k: (b, 0, j)),
        ),
        compiler_params=pltpu.CompilerParams(
            dimension_semantics=("parallel", "parallel", "arbitrary"),
            vmem_limit_bytes=_vmem_limit(ws),
        ),
    )(x3, rf_t, w_l)
    return out3.reshape(B, Nv)


# ------------------------------ module ports ------------------------------


class ReceptiveField:
    """JAX/Pallas port of the PyTorch ReceptiveField module.

    __call__(features) returns sigma with shape [B, C_total, Nv] (== torch.cat(out, dim=1)
    with map_times_rf producing [B, C_k, Nv]); this is the layout EncoderReadOut consumes.
    The PyTorch docstring's [B, Nv, C_total] is simply the transpose of this.
    """

    def __init__(self, Nv, rf_sizes, layer_to_rf_size, channel_basis, key):
        self.Nv = Nv
        self.rf_sizes = [(int(hw[0]), int(hw[1])) for hw in rf_sizes]
        self.layer_to_rf_size = dict(layer_to_rf_size)
        self.channel_basis = {k: list(v) for k, v in channel_basis.items()}

        keys = jax.random.split(key, max(len(self.rf_sizes), 1))
        self.rfs = []     # raw params [Nv, H, W] f32 (kaiming_uniform_, a=sqrt(5))
        self.rfs_t = []   # forward-ready [S_pad, Nv] bf16 (transposed + zero-padded ONCE)
        self.plans = []   # (S_pad, tk, nk) per rf size
        for k, (H, W) in zip(keys, self.rf_sizes):
            bound = 1.0 / math.sqrt(H * W)        # torch fan_in = H*W for a [Nv, H, W] tensor
            rf = jax.random.uniform(k, (Nv, H, W), jnp.float32, -bound, bound)
            self.rfs.append(rf)
            S = H * W
            S_pad, tk, nk = _plan_spatial(S)
            rf_t = jnp.zeros((S_pad, Nv), jnp.bfloat16)
            rf_t = rf_t.at[:S, :].set(rf.reshape(Nv, S).T.astype(jnp.bfloat16))
            self.rfs_t.append(rf_t)
            self.plans.append((S_pad, tk, nk))

    def _prep_x(self, name, x_):
        """Channel-select + flatten + bf16 cast (spatial zero-pad rides the cast)."""
        ch = jnp.asarray(self.channel_basis[name], dtype=jnp.int32)
        # TODO(synk): fuse the channel gather into the kernel with scalar-prefetched
        # channel ids (PrefetchScalarGridSpec(num_scalar_prefetch=1) + per-row index_map)
        # so only the selected channels are DMA'd from HBM.
        x_sel = jnp.take(x_, ch, axis=1)                     # [B, C_k, H, W]
        B, C, H, W = x_sel.shape
        S = H * W
        S_pad, tk, _ = self.plans[self.layer_to_rf_size[name]]
        x3 = x_sel.reshape(B, C, S).astype(jnp.bfloat16)     # bf16 x: half DMA + half VMEM
        if S_pad != S:
            # The zero pad fuses with the bf16 cast into one XLA materialization; padded
            # columns (and the zero rf_t rows >= S) contribute nothing to the contraction.
            x3 = jnp.pad(x3, ((0, 0), (0, 0), (0, S_pad - S)))
        return x3, tk

    def layer_sigma(self, name, x_):
        """sigma for one feature-dict entry: [B, C_k, Nv] float32."""
        x3, tk = self._prep_x(name, x_)
        B, C, S_pad = x3.shape
        rf_t = self.rfs_t[self.layer_to_rf_size[name]]
        sig = _sigma_matmul(x3.reshape(B * C, S_pad), rf_t, tk)
        return sig.reshape(B, C, self.Nv)

    def layer_readout_contrib(self, name, x_, w_layer):
        """Fused (sigma_k * w_k).sum(channel) for one layer: [B, Nv] float32."""
        x3, tk = self._prep_x(name, x_)
        rf_t = self.rfs_t[self.layer_to_rf_size[name]]
        return _encoder_layer_contrib(x3, rf_t, w_layer.astype(jnp.float32), tk)

    def __call__(self, x):
        # TODO(synk): layers still run as separate pallas_calls; fusing them (layers
        # concatenated along the row axis with per-layer rf picked via scalar prefetch)
        # would amortize the per-call pipeline fill/drain for tiny feature maps.
        sig = [self.layer_sigma(name, x_) for name, x_ in x.items()]
        return jnp.concatenate(sig, axis=1)


class EncoderReadOut:
    """JAX port of EncoderReadOut: (sigma * w[None]).sum(-2) + b.

    The weighted channel reduction is fused into the Pallas kernel per layer, so the
    concatenated [B, C_total, Nv] sigma never hits HBM on the encoder forward.
    """

    def __init__(self, rfs, N_channels, key):
        self.rfs = rfs
        self.N_channels = N_channels
        self.Nv = rfs.Nv
        kw, kb = jax.random.split(key)
        bound = 1.0 / math.sqrt(self.Nv)  # kaiming_uniform_(a=sqrt(5)) on [N_channels, Nv]
        self.w = jax.random.uniform(kw, (N_channels, self.Nv), jnp.float32,
                                    minval=-bound, maxval=bound)
        self.b = jax.random.uniform(kb, (self.Nv,), jnp.float32, 0.0, 1.0)

    def __call__(self, features):
        acc = None
        off = 0
        for name, x_ in features.items():
            C_k = len(self.rfs.channel_basis[name])
            w_k = self.w[off:off + C_k, :]                                  # [C_k, Nv]
            contrib = self.rfs.layer_readout_contrib(name, x_, w_k)        # [B, Nv]
            acc = contrib if acc is None else acc + contrib
            off += C_k
        return acc + self.b[None, :]


class Encoder:
    """JAX/Pallas port of the PyTorch Encoder (vision branch).

    The torch backbone / torchvision feature extractor is loaded from disk in the original
    code and has no Pallas equivalent here, so the forward consumes the already-extracted
    feature dict {layer_name: [B, C, H, W]} directly.
    """
    # TODO(synk): ImageFeatures (backbone feature extraction via torch.load +
    # create_feature_extractor) and EncoderTextReadOut (CLIP text branch) are not ported.

    def __init__(self, Nv, rf_sizes, layer_to_rf_size, channel_basis, key):
        k_rf, k_ro = jax.random.split(key)
        self.Nv = Nv
        self.rfs = ReceptiveField(Nv, rf_sizes, layer_to_rf_size, channel_basis, k_rf)
        self.N_channels = sum(len(v) for v in channel_basis.values())
        self.readout = EncoderReadOut(self.rfs, self.N_channels, k_ro)

    def __call__(self, features):
        return self.readout(features)


# --------------------------- pure-JAX references ---------------------------


def _reference_sigma(rf_module, x, match_bf16=True):
    out = []
    for name, x_ in x.items():
        ch = jnp.asarray(rf_module.channel_basis[name], dtype=jnp.int32)
        x_sel = jnp.take(x_, ch, axis=1)
        rf = rf_module.rfs[rf_module.layer_to_rf_size[name]]
        if match_bf16:   # mirror the kernel's bf16 MXU inputs (f32 accumulation)
            x_sel = x_sel.astype(jnp.bfloat16).astype(jnp.float32)
            rf = rf.astype(jnp.bfloat16).astype(jnp.float32)
        out.append(jnp.einsum("bchw,vhw->bcv", x_sel, rf,
                              precision=jax.lax.Precision.HIGHEST))
    return jnp.concatenate(out, axis=1)


def _reference_encoder(enc, x, match_bf16=True):
    sigma = _reference_sigma(enc.rfs, x, match_bf16)
    return (sigma * enc.readout.w[None, :, :]).sum(-2) + enc.readout.b[None, :]


if __name__ == "__main__":
    key = jax.random.PRNGKey(0)
    k_mod, k1, k2 = jax.random.split(key, 3)

    B, Nv = 2, 128
    rf_sizes = [(16, 16), (8, 8)]
    layer_to_rf_size = {"conv1": 0, "conv2": 1}
    channel_basis = {"conv1": [0, 1, 2, 3], "conv2": [0, 1, 3, 5]}

    enc = Encoder(Nv, rf_sizes, layer_to_rf_size, channel_basis, k_mod)

    features = {
        "conv1": jax.random.normal(k1, (B, 4, 16, 16), dtype=jnp.float32),
        "conv2": jax.random.normal(k2, (B, 6, 8, 8), dtype=jnp.float32),
    }

    # ReceptiveField (Pallas sigma kernel) output: [B, C_total, Nv]
    sigma = jax.block_until_ready(enc.rfs(features))
    assert sigma.shape == (B, 4 + 4, Nv), sigma.shape

    sig_ref_bf16 = _reference_sigma(enc.rfs, features, match_bf16=True)
    assert jnp.allclose(sigma, sig_ref_bf16, atol=1e-3, rtol=1e-3), "sigma mismatch (bf16 ref)"
    sig_ref_f32 = _reference_sigma(enc.rfs, features, match_bf16=False)
    assert jnp.allclose(sigma, sig_ref_f32, atol=3e-2, rtol=3e-2), "sigma mismatch (f32 ref)"

    # Full Encoder forward (fused readout kernel): [B, Nv]
    encoder_forward = jax.jit(enc.__call__)
    out = jax.block_until_ready(encoder_forward(features))
    assert out.shape == (B, Nv), out.shape

    enc_ref_bf16 = _reference_encoder(enc, features, match_bf16=True)
    assert jnp.allclose(out, enc_ref_bf16, atol=1e-3, rtol=1e-3), "encoder mismatch (bf16 ref)"
    enc_ref_f32 = _reference_encoder(enc, features, match_bf16=False)
    assert jnp.allclose(out, enc_ref_f32, atol=3e-2, rtol=3e-2), "encoder mismatch (f32 ref)"

    print("KERNEL_OK")
</pallas_src>

<mosaic_0001>
module attributes {stable_mosaic.version = 11 : i64} {
  func.func @_sigma_kernel(%arg0: i32, %arg1: i32, %arg2: i32, %arg3: memref<8x256xbf16, #tpu.memory_space<vmem>>, %arg4: memref<256x128xbf16, #tpu.memory_space<vmem>>, %arg5: memref<8x128xf32, #tpu.memory_space<vmem>>) attributes {dimension_semantics = [#tpu.dimension_semantics<parallel>, #tpu.dimension_semantics<parallel>, #tpu.dimension_semantics<arbitrary>], iteration_bounds = array<i64: 1, 1, 1>, scalar_prefetch = 0 : i64, scratch_operands = 0 : i64, tpu.core_type = #tpu.core_type<tc>, window_params = [{transform_indices = @transform_0, window_bounds = array<i64: 8, 256>}, {transform_indices = @transform_1, window_bounds = array<i64: 256, 128>}, {transform_indices = @transform_2, window_bounds = array<i64: 8, 128>}]} {
    %c0 = arith.constant 0 : index
    %c0_0 = arith.constant 0 : index
    %0 = vector.load %arg3[%c0, %c0_0] : memref<8x256xbf16, #tpu.memory_space<vmem>>, vector<8x256xbf16>
    %c0_1 = arith.constant 0 : index
    %c0_2 = arith.constant 0 : index
    %1 = vector.load %arg4[%c0_1, %c0_2] : memref<256x128xbf16, #tpu.memory_space<vmem>>, vector<256x128xbf16>
    %cst = arith.constant dense<0.000000e+00> : vector<8x128xf32>
    %2 = tpu.matmul %0, %1, %cst {dimension_numbers = #tpu.dot_dimension_numbers<[1], [0], [0], [1], [0, 0, 1, 1], [], []>} : vector<8x256xbf16>, vector<256x128xbf16>, vector<8x128xf32> -> vector<8x128xf32>
    %c0_i32 = arith.constant 0 : i32
    %3 = arith.cmpi eq, %arg2, %c0_i32 : i32
    %4 = arith.extui %3 : i1 to i32
    %c0_i32_3 = arith.constant 0 : i32
    %5 = arith.cmpi ne, %4, %c0_i32_3 : i32
    scf.if %5 {
      %c0_6 = arith.constant 0 : index
      %c0_7 = arith.constant 0 : index
      %9 = vector.load %arg5[%c0_6, %c0_7] : memref<8x128xf32, #tpu.memory_space<vmem>>, vector<8x128xf32>
      tpu.vector_store %arg5[%c0_6, %c0_7], %2 {strides = array<i32>} : memref<8x128xf32, #tpu.memory_space<vmem>>, vector<8x128xf32>,
    } else {
    }
    %c0_i32_4 = arith.constant 0 : i32
    %6 = arith.cmpi sgt, %arg2, %c0_i32_4 : i32
    %7 = arith.extui %6 : i1 to i32
    %c0_i32_5 = arith.constant 0 : i32
    %8 = arith.cmpi ne, %7, %c0_i32_5 : i32
    scf.if %8 {
      %c0_6 = arith.constant 0 : index
      %c0_7 = arith.constant 0 : index
      %9 = vector.load %arg5[%c0_6, %c0_7] : memref<8x128xf32, #tpu.memory_space<vmem>>, vector<8x128xf32>
      %10 = arith.addf %9, %2 : vector<8x128xf32>
      %c0_8 = arith.constant 0 : index
      %c0_9 = arith.constant 0 : index
      %11 = vector.load %arg5[%c0_8, %c0_9] : memref<8x128xf32, #tpu.memory_space<vmem>>, vector<8x128xf32>
      tpu.vector_store %arg5[%c0_8, %c0_9], %10 {strides = array<i32>} : memref<8x128xf32, #tpu.memory_space<vmem>>, vector<8x128xf32>,
    } else {
    }
    return
  }
  func.func @transform_0(%arg0: i32, %arg1: i32, %arg2: i32) -> (i32, i32) {
    %c0_i32 = arith.constant 0 : i32
    return %arg0, %arg2 : i32, i32
  }
  func.func @transform_1(%arg0: i32, %arg1: i32, %arg2: i32) -> (i32, i32) {
    %c0_i32 = arith.constant 0 : i32
    return %arg2, %arg1 : i32, i32
  }
  func.func @transform_2(%arg0: i32, %arg1: i32, %arg2: i32) -> (i32, i32) {
    %c0_i32 = arith.constant 0 : i32
    return %arg0, %arg1 : i32, i32
  }
}

</mosaic_0001>

<llo_original>
// kernel: tpu_custom_call.1
$region0: #{tpu_custom_call.1}
  #allocation0 [shape = 'u32[]', space=smem, size = 0x4, offset = 0x4, fixed_abs, tag = 'smem constant byte address 0x4 - core index']
  #allocation1 [shape = 'u32[72,128]{1,0:T(1,128)}', space=vmem, size = 0x9000, scoped, tag = 'internal scratch']
  %s0 = inlined_call_operand.hbm [shape: bf16[8,256], index: 0, kind: input, shape index: {}]
  %s1 = inlined_call_operand.hbm [shape: bf16[256,128], index: 1, kind: input, shape index: {}]
  %s2 = inlined_call_operand.hbm [shape: f32[8,128], index: 2, kind: output, shape index: {}]
  %s3 = sld [smem:[#allocation0]]
  $region34: #{tpu_custom_call.1} parent=0
    _
  %s5 = ssub.s32 1, %s3
  %s6 = scalar_select 0, %s5, %s3
  $region1: #{tpu_custom_call.1} parent=0
    #allocation2 [shape = 'u8[4096]{0}', space=vmem, size = 0x1000, scoped, tag = 'input window, operand 0, single buffered']
    #allocation3 [shape = 's32[1]{0}', space=sflag, size = 0x4, scoped, tag = 'scoped memory for tpu_custom_call.1']
    #allocation4 [shape = 's32[1]{0}', space=sflag, size = 0x4, scoped, tag = 'scoped memory for tpu_custom_call.1']
    #allocation5 [shape = 'u8[65536]{0}', space=vmem, size = 0x10000, scoped, tag = 'input window, operand 1, single buffered']
    #allocation6 [shape = 's32[1]{0}', space=sflag, size = 0x4, scoped, tag = 'scoped memory for tpu_custom_call.1']
    #allocation7 [shape = 'u8[4096]{0}', space=vmem, size = 0x1000, scoped, tag = 'output window, operand 0, single buffered']
    %7 = vsyncpa [#allocation3], 0
    %8 = vsyncpa [#allocation6], 0
    %9 = vsyncpa [#allocation4], 0
    // Predicated region
    $region2: #{tpu_custom_call.1} parent=1 // pred_check
      _
    $region3: #{tpu_custom_call.1} parent=1 // pred_check_branch
      %11 = sbr.rel (0) target = $region5
    $region4: #{tpu_custom_call.1} parent=1 // pred_region
      %13 = vsyncadd [#allocation3], 0
      %s15 = sshll.u32 %s0, 4
      %s16 = int_to_ptr.hbm [resolvable:$true] %s15
      %s17 = sshll.u32 [#allocation2], 4
      %s18 = int_to_ptr.vmem [resolvable:$true] %s17
      %20 = dma.hbm_to_vmem [thread:$0]  %s16, 128, %s18, [#allocation3]
    $region5: #{tpu_custom_call.1} parent=1 // pred_fallthru
      _
    // Predicated region
    $region6: #{tpu_custom_call.1} parent=1 // pred_check
      _
    $region7: #{tpu_custom_call.1} parent=1 // pred_check_branch
      %22 = sbr.rel (0) target = $region9
    $region8: #{tpu_custom_call.1} parent=1 // pred_region
      %24 = vsyncadd [#allocation6], 0
      %s25 = sshll.u32 %s1, 4
      %s26 = int_to_ptr.hbm [resolvable:$true] %s25
      %s27 = sshll.u32 [#allocation5], 4
      %s28 = int_to_ptr.vmem [resolvable:$true] %s27
      %33 = dma.hbm_to_vmem [thread:$0]  %s26, 2048, %s28, [#allocation6], 64, 64, 4
    $region9: #{tpu_custom_call.1} parent=1 // pred_fallthru
      _
    // Predicated region
    $region10: #{tpu_custom_call.1} parent=1 // pred_check
      _
    $region11: #{tpu_custom_call.1} parent=1 // pred_check_branch
      %35 = sbr.rel (0) target = $region13
    $region12: #{tpu_custom_call.1} parent=1 // pred_region
      %37 = dma.done [#allocation3], 128
    $region13: #{tpu_custom_call.1} parent=1 // pred_fallthru
      _
    // Predicated region
    $region14: #{tpu_custom_call.1} parent=1 // pred_check
      _
    $region15: #{tpu_custom_call.1} parent=1 // pred_check_branch
      %39 = sbr.rel (0) target = $region17
    $region16: #{tpu_custom_call.1} parent=1 // pred_region
      %41 = dma.done [#allocation6], 2048
    $region17: #{tpu_custom_call.1} parent=1 // pred_fallthru
      _
    %v42 = vld [vmem:[#allocation2] sm:$0xff]
    %v43 = vld [vmem:[#allocation5] sm:$0xf]
    %v44 = vld [vmem:[#allocation5 + $0x4] sm:$0xf]
    %v45 = vld [vmem:[#allocation5 + $0x8] sm:$0xf]
    %v46 = vld [vmem:[#allocation5 + $0xc] sm:$0xf]
    %v47 = vld [vmem:[#allocation5 + $0x10] sm:$0xf]
    %v48 = vld [vmem:[#allocation5 + $0x14] sm:$0xf]
    %v49 = vld [vmem:[#allocation5 + $0x18] sm:$0xf]
    %v50 = vld [vmem:[#allocation5 + $0x1c] sm:$0xf]
    %v51 = vld [vmem:[#allocation5 + $0x20] sm:$0xf]
    %v52 = vld [vmem:[#allocation5 + $0x24] sm:$0xf]
    %v53 = vld [vmem:[#allocation5 + $0x28] sm:$0xf]
    %v54 = vld [vmem:[#allocation5 + $0x2c] sm:$0xf]
    %v55 = vld [vmem:[#allocation5 + $0x30] sm:$0xf]
    %v56 = vld [vmem:[#allocation5 + $0x34] sm:$0xf]
    %v57 = vld [vmem:[#allocation5 + $0x38] sm:$0xf]
    %v58 = vld [vmem:[#allocation5 + $0x3c] sm:$0xf]
    %v59 = vld [vmem:[#allocation5 + $0x40] sm:$0xf]
    %v60 = vld [vmem:[#allocation5 + $0x44] sm:$0xf]
    %v61 = vld [vmem:[#allocation5 + $0x48] sm:$0xf]
    %v62 = vld [vmem:[#allocation5 + $0x4c] sm:$0xf]
    %v63 = vld [vmem:[#allocation5 + $0x50] sm:$0xf]
    %v64 = vld [vmem:[#allocation5 + $0x54] sm:$0xf]
    %v65 = vld [vmem:[#allocation5 + $0x58] sm:$0xf]
    %v66 = vld [vmem:[#allocation5 + $0x5c] sm:$0xf]
    %v67 = vld [vmem:[#allocation5 + $0x60] sm:$0xf]
    %v68 = vld [vmem:[#allocation5 + $0x64] sm:$0xf]
    %v69 = vld [vmem:[#allocation5 + $0x68] sm:$0xf]
    %v70 = vld [vmem:[#allocation5 + $0x6c] sm:$0xf]
    %v71 = vld [vmem:[#allocation5 + $0x70] sm:$0xf]
    %v72 = vld [vmem:[#allocation5 + $0x74] sm:$0xf]
    %v73 = vld [vmem:[#allocation5 + $0x78] sm:$0xf]
    %v74 = vld [vmem:[#allocation5 + $0x7c] sm:$0xf]
    %v76 = vunpack.c.l.b16 %v42
    %v77 = vunpack.c.h.b16 %v42
    %v78 = vpack.c.b16 %v76, %v76
    %v79 = vpack.c.b16 %v77, %v77
    %v114 = vunpack.c.l.b16 %v43
    %v115 = vunpack.c.l.b16 %v44
    %v116 = vunpack.c.l.b16 %v45
    %v117 = vunpack.c.l.b16 %v46
    %v118 = vunpack.c.l.b16 %v47
    %v119 = vunpack.c.l.b16 %v48
    %v120 = vunpack.c.l.b16 %v49
    %v121 = vunpack.c.l.b16 %v50
    %v122 = vunpack.c.l.b16 %v51
    %v123 = vunpack.c.l.b16 %v52
    %v124 = vunpack.c.l.b16 %v53
    %v125 = vunpack.c.l.b16 %v54
    %v126 = vunpack.c.l.b16 %v55
    %v127 = vunpack.c.l.b16 %v56
    %v128 = vunpack.c.l.b16 %v57
    %v129 = vunpack.c.l.b16 %v58
    %v130 = vunpack.c.l.b16 %v59
    %v131 = vunpack.c.l.b16 %v60
    %v132 = vunpack.c.l.b16 %v61
    %v133 = vunpack.c.l.b16 %v62
    %v134 = vunpack.c.l.b16 %v63
    %v135 = vunpack.c.l.b16 %v64
    %v136 = vunpack.c.l.b16 %v65
    %v137 = vunpack.c.l.b16 %v66
    %v138 = vunpack.c.l.b16 %v67
    %v139 = vunpack.c.l.b16 %v68
    %v140 = vunpack.c.l.b16 %v69
    %v141 = vunpack.c.l.b16 %v70
    %v142 = vunpack.c.l.b16 %v71
    %v143 = vunpack.c.l.b16 %v72
    %v144 = vunpack.c.l.b16 %v73
    %v145 = vunpack.c.l.b16 %v74
    %v146 = vpack.c.b16 %v115, %v114
    %v147 = vpack.c.b16 %v117, %v116
    %v148 = vpack.c.b16 %v119, %v118
    %v149 = vpack.c.b16 %v121, %v120
    %v150 = vpack.c.b16 %v123, %v122
    %v151 = vpack.c.b16 %v125, %v124
    %v152 = vpack.c.b16 %v127, %v126
    %v153 = vpack.c.b16 %v129, %v128
    %v154 = vpack.c.b16 %v131, %v130
    %v155 = vpack.c.b16 %v133, %v132
    %v156 = vpack.c.b16 %v135, %v134
    %v157 = vpack.c.b16 %v137, %v136
    %v158 = vpack.c.b16 %v139, %v138
    %v159 = vpack.c.b16 %v141, %v140
    %v160 = vpack.c.b16 %v143, %v142
    %v161 = vpack.c.b16 %v145, %v144
    %178 = vmatpush.bf16.msra.mxu0 %v153
    %179 = vmatpush.bf16.msra.mxu0 %v152
    %180 = vmatpush.bf16.msra.mxu0 %v151
    %181 = vmatpush.bf16.msra.mxu0 %v150
    %182 = vmatpush.bf16.msra.mxu0 %v149
    %183 = vmatpush.bf16.msra.mxu0 %v148
    %184 = vmatpush.bf16.msra.mxu0 %v147
    %185 = vmatpush.bf16.msra.mxu0 %v146
    %186 = vmatmul.bf16.gmra.mxu0 %v78
    %v187 = vpop.f32.mrf.mxu0
    %v188 = vadd.f32 0.0, %v187
    %v189 = vpop.f32.mrf.mxu0
    %190 = vdwg.mxu0
    %191 = vmatpush.bf16.msra.mxu0 %v161
    %192 = vmatpush.bf16.msra.mxu0 %v160
    %193 = vmatpush.bf16.msra.mxu0 %v159
    %194 = vmatpush.bf16.msra.mxu0 %v158
    %195 = vmatpush.bf16.msra.mxu0 %v157
    %196 = vmatpush.bf16.msra.mxu0 %v156
    %197 = vmatpush.bf16.msra.mxu0 %v155
    %198 = vmatpush.bf16.msra.mxu0 %v154
    %199 = vmatmul.bf16.gmra.mxu0 %v79
    %v200 = vpop.f32.mrf.mxu0
    %v201 = vadd.f32 %v188, %v200
    %v202 = vpop.f32.mrf.mxu0
    %203 = vdwg.mxu0
    %p204 = scmp.eq.s32.totalorder 0, 0
    // Predicated region
    $region18: #{tpu_custom_call.1} parent=1 // pred_check
      %p205 = pneg %p204
    $region19: #{tpu_custom_call.1} parent=1 // pred_check_branch
      %207 = sbr.rel (%p205) target = $region21
    $region20: #{tpu_custom_call.1} parent=1 // pred_region
      %208 = vst [vmem:[#allocation7] sm:$0xff] %v201
    $region21: #{tpu_custom_call.1} parent=1 // pred_fallthru
      _
    %p209 = scmp.gt.s32.totalorder 0, 0
    // Predicated region
    $region22: #{tpu_custom_call.1} parent=1 // pred_check
      %p210 = pneg %p209
    $region23: #{tpu_custom_call.1} parent=1 // pred_check_branch
      %212 = sbr.rel (%p210) target = $region25
    $region24: #{tpu_custom_call.1} parent=1 // pred_region
      %v213 = vld [vmem:[#allocation7] sm:$0xff]
      %v214 = vadd.f32 %v213, %v201
      %215 = vst [vmem:[#allocation7] sm:$0xff] %v214
    $region25: #{tpu_custom_call.1} parent=1 // pred_fallthru
      _
    // Predicated region
    $region26: #{tpu_custom_call.1} parent=1 // pred_check
      _
    $region27: #{tpu_custom_call.1} parent=1 // pred_check_branch
      %217 = sbr.rel (0) target = $region29
    $region28: #{tpu_custom_call.1} parent=1 // pred_region
      %219 = vsyncadd [#allocation4], 0
      %s221 = sshll.u32 [#allocation7], 4
      %s222 = int_to_ptr.vmem [resolvable:$true] %s221
      %s223 = sshll.u32 %s2, 4
      %s224 = int_to_ptr.hbm [resolvable:$true] %s223
      %226 = dma.vmem_to_hbm [thread:$0]  %s222, 128, %s224, [#allocation4]
    $region29: #{tpu_custom_call.1} parent=1 // pred_fallthru
      _
    // Predicated region
    $region30: #{tpu_custom_call.1} parent=1 // pred_check
      _
    $region31: #{tpu_custom_call.1} parent=1 // pred_check_branch
      %228 = sbr.rel (0) target = $region33
    $region32: #{tpu_custom_call.1} parent=1 // pred_region
      %230 = dma.done [#allocation4], 128
    $region33: #{tpu_custom_call.1} parent=1 // pred_fallthru
      _
    %231 = vsyncpa [#allocation3], 1
    %232 = vsyncpa [#allocation6], 1
    %233 = vsyncpa [#allocation4], 1

</llo_original>
